<compile_context>
chip_gen: v6e
topology: v6e:2x2x1
jax: 0.10.0
libtpu: 0.0.40
codegen_flags: <defaults>
</compile_context>

<pallas_src>
import functools

import jax
import jax.numpy as jnp
from jax.experimental import pallas as pl
from jax.experimental.pallas import tpu as pltpu


def decoder_gru_seq_kernel(ids_ref, emb_ref, h0_ref, w_ref, b_ref,
                           out_ref, h_scratch, *, hidden_size, batch):
    """Teacher-forced GRU decode; one grid step == one time step.

    ids_ref  : SMEM [T, B] int32     token ids (scalar prefetch)
    emb_ref  : VMEM [V, E]  f32      embedding table (resident across steps)
    h0_ref   : VMEM [B, H]  f32      initial hidden state (read only at t == 0)
    w_ref    : VMEM [H+E, 4H] bf16   fused weights (resident across steps)
    b_ref    : VMEM [1, 4H] f32      fused biases   (resident across steps)
    out_ref  : VMEM [1, B, H] f32    hidden state emitted at this step
    h_scratch: VMEM [B, H]  f32      hidden state carried across grid steps
    """
    H = hidden_size
    t = pl.program_id(0)

    @pl.when(t == 0)
    def _():
        h_scratch[...] = h0_ref[...]

    h = h_scratch[...]                                            # [B, H] f32

    # Embedding row gather straight from the VMEM-resident table (no per-row DMA).
    rows = [emb_ref[pl.ds(ids_ref[t, i], 1), :] for i in range(batch)]
    x = jnp.concatenate(rows, axis=0)                             # [B, E] f32

    # Single fused MXU dot: [B, H+E] x [H+E, 4H] -> [B, 4H] f32 accumulate.
    #   cols [0:2H]  = W_ir/W_iz x + W_hr/W_hz h   (+ folded b)
    #   cols [2H:3H] = W_in x                      (+ b_in)
    #   cols [3H:4H] = W_hn h                      (+ b_hn)
    xh = jnp.concatenate([h, x], axis=1).astype(jnp.bfloat16)     # [B, H+E]
    g = jnp.dot(xh, w_ref[...], preferred_element_type=jnp.float32) + b_ref[...]

    rz = jax.nn.sigmoid(g[:, :2 * H])                             # [B, 2H] f32
    r = rz[:, :H]
    z = rz[:, H:]
    n = jnp.tanh(g[:, 2 * H:3 * H] + r * g[:, 3 * H:4 * H])
    h_new = n + z * (h - n)                                       # == (1-z)*n + z*h

    h_scratch[...] = h_new
    out_ref[0] = h_new.astype(out_ref.dtype)


def prepare_decoder_params(params):
    """One-time parameter prep (hoisted out of the per-step path).

    params (PyTorch layout, f32): embedding [V,E], w_ih [3H,E], w_hh [3H,H],
    b_ih [3H], b_hh [3H]. Gate order (r, z, n).
    """
    H = params["w_hh"].shape[1]
    E = params["w_ih"].shape[1]
    wih_t = params["w_ih"].T.astype(jnp.float32)                  # [E, 3H]
    whh_t = params["w_hh"].T.astype(jnp.float32)                  # [H, 3H]

    w_fused = jnp.zeros((H + E, 4 * H), jnp.float32)
    w_fused = w_fused.at[:H, :2 * H].set(whh_t[:, :2 * H])        # W_h{r,z}
    w_fused = w_fused.at[:H, 3 * H:].set(whh_t[:, 2 * H:])        # W_hn
    w_fused = w_fused.at[H:, :2 * H].set(wih_t[:, :2 * H])        # W_i{r,z}
    w_fused = w_fused.at[H:, 2 * H:3 * H].set(wih_t[:, 2 * H:])   # W_in

    bias = jnp.concatenate([
        params["b_ih"][:2 * H] + params["b_hh"][:2 * H],          # r,z folded
        params["b_ih"][2 * H:],                                   # b_in
        params["b_hh"][2 * H:],                                   # b_hn
    ]).reshape(1, 4 * H).astype(jnp.float32)

    return {
        "embedding": params["embedding"].astype(jnp.float32),     # [V, E]
        "w_fused": w_fused.astype(jnp.bfloat16),                  # [H+E, 4H]
        "bias": bias,                                             # [1, 4H]
        "hidden_size": H,
        "emb_size": E,
    }


def gru_decode_pallas(token_ids, h0, prep):
    """token_ids: [T, B] int32, h0: [B, H] f32 -> per-step hidden states [T, B, H]."""
    T, B = token_ids.shape
    H = prep["hidden_size"]
    E = prep["emb_size"]
    V = prep["embedding"].shape[0]

    kernel = functools.partial(decoder_gru_seq_kernel, hidden_size=H, batch=B)

    resident = lambda t, ids: (0, 0)      # constant block -> stays in VMEM across steps

    flops = 2 * T * B * (H + E) * 4 * H
    bytes_accessed = (V * E * 4                       # embedding table (once)
                      + (H + E) * 4 * H * 2           # fused bf16 weights (once)
                      + 4 * H * 4 + B * H * 4         # bias + h0 (once)
                      + T * B * 4                     # token ids
                      + T * B * H * 4)                # per-step outputs

    return pl.pallas_call(
        kernel,
        out_shape=jax.ShapeDtypeStruct((T, B, H), jnp.float32),
        grid_spec=pltpu.PrefetchScalarGridSpec(
            num_scalar_prefetch=1,
            grid=(T,),
            in_specs=[
                pl.BlockSpec((V, E), resident),            # embedding table
                pl.BlockSpec((B, H), resident),            # initial hidden
                pl.BlockSpec((H + E, 4 * H), resident),    # fused weights
                pl.BlockSpec((1, 4 * H), resident),        # fused biases
            ],
            out_specs=pl.BlockSpec((1, B, H), lambda t, ids: (t, 0, 0)),
            scratch_shapes=[pltpu.VMEM((B, H), jnp.float32)],
        ),
        compiler_params=pltpu.CompilerParams(
            dimension_semantics=("arbitrary",)),
        cost_estimate=pl.CostEstimate(flops=flops, transcendentals=T * B * 3 * H,
                                      bytes_accessed=bytes_accessed),
    )(token_ids, prep["embedding"], h0, prep["w_fused"], prep["bias"])


def decoder_forward(token_ids, hidden, prep):
    """Mirror of Decoder.forward(input, hidden, concat=None) with dropout=0.

    token_ids : [B] int32;  hidden : [layers=1, B, H] f32
    returns (rnn_output [B,H], hidden [1,B,H]) — two views of the same new state.
    """
    outs = gru_decode_pallas(token_ids[None, :], hidden[0], prep)   # [1, B, H]
    return outs[0], outs


def decoder_decode_steps(token_ids_tb, hidden, prep):
    """Teacher-forced multi-step decode in ONE pallas_call (time loop in the grid)."""
    outs = gru_decode_pallas(token_ids_tb, hidden[0], prep)         # [T, B, H]
    return outs, outs[-1][None]


def gru_step_ref(x, h, w_ih, w_hh, b_ih, b_hh):
    """Pure-JAX f32 reference (PyTorch GRU math, gate order r,z,n)."""
    H = h.shape[-1]
    gi = x @ w_ih.T + b_ih
    gh = h @ w_hh.T + b_hh
    r = jax.nn.sigmoid(gi[:, :H] + gh[:, :H])
    z = jax.nn.sigmoid(gi[:, H:2 * H] + gh[:, H:2 * H])
    n = jnp.tanh(gi[:, 2 * H:] + r * gh[:, 2 * H:])
    return (1.0 - z) * n + z * h


if __name__ == "__main__":
    VOCAB = 16
    EMB = 64        # emb_size
    HID = 128       # hidden_size (lane-aligned so gate slices fall on 128 boundaries)
    BATCH = 8
    LAYERS = 1      # Decoder default
    STEPS = 4       # teacher-forced decode length for the grid version

    key = jax.random.PRNGKey(0)
    k_emb, k_wih, k_whh, k_bih, k_bhh, k_ids, k_h = jax.random.split(key, 7)

    bound = 1.0 / jnp.sqrt(jnp.float32(HID))
    raw_params = {
        "embedding": jax.random.normal(k_emb, (VOCAB, EMB), jnp.float32),
        "w_ih": jax.random.uniform(k_wih, (3 * HID, EMB), jnp.float32, -bound, bound),
        "w_hh": jax.random.uniform(k_whh, (3 * HID, HID), jnp.float32, -bound, bound),
        "b_ih": jax.random.uniform(k_bih, (3 * HID,), jnp.float32, -bound, bound),
        "b_hh": jax.random.uniform(k_bhh, (3 * HID,), jnp.float32, -bound, bound),
    }
    prep = prepare_decoder_params(raw_params)   # one-time: transpose/fuse/cast/fold

    token_ids = jax.random.randint(k_ids, (STEPS, BATCH), 0, VOCAB, jnp.int32)
    # initHidden(batch) would give zeros; use random h to exercise the state path too.
    hidden0 = jax.random.normal(k_h, (LAYERS, BATCH, HID), jnp.float32)

    # --- single step: exactly Decoder.forward ---------------------------------
    rnn_output, hidden1 = decoder_forward(token_ids[0], hidden0, prep)
    jax.block_until_ready((rnn_output, hidden1))

    emb0 = raw_params["embedding"][token_ids[0]]
    h_ref = gru_step_ref(emb0, hidden0[0], raw_params["w_ih"], raw_params["w_hh"],
                         raw_params["b_ih"], raw_params["b_hh"])
    assert rnn_output.shape == (BATCH, HID)
    assert hidden1.shape == (LAYERS, BATCH, HID)
    # bf16 MXU operands -> loosened tolerance vs. the f32 reference (intentional).
    assert jnp.allclose(rnn_output, h_ref, atol=2.5e-2, rtol=2.5e-2)
    assert jnp.allclose(hidden1[0], h_ref, atol=2.5e-2, rtol=2.5e-2)

    # --- multi-step teacher-forced decode: time loop inside the grid ----------
    outs, hidden_T = decoder_decode_steps(token_ids, hidden0, prep)
    jax.block_until_ready((outs, hidden_T))

    h_seq = hidden0[0]
    for t in range(STEPS):
        h_seq = gru_step_ref(raw_params["embedding"][token_ids[t]], h_seq,
                             raw_params["w_ih"], raw_params["w_hh"],
                             raw_params["b_ih"], raw_params["b_hh"])
        assert jnp.allclose(outs[t], h_seq, atol=4e-2, rtol=4e-2)
    assert jnp.allclose(hidden_T[0], h_seq, atol=4e-2, rtol=4e-2)

    print("KERNEL_OK")
</pallas_src>

<mosaic_0001>
module attributes {stable_mosaic.version = 11 : i64} {
  func.func @decoder_gru_seq_kernel(%arg0: i32, %arg1: memref<1x8xi32, #tpu.memory_space<smem>>, %arg2: memref<16x64xf32, #tpu.memory_space<vmem>>, %arg3: memref<8x128xf32, #tpu.memory_space<vmem>>, %arg4: memref<192x512xbf16, #tpu.memory_space<vmem>>, %arg5: memref<1x512xf32, #tpu.memory_space<vmem>>, %arg6: memref<1x8x128xf32, #tpu.memory_space<vmem>>, %arg7: memref<8x128xf32, #tpu.memory_space<vmem>>) attributes {dimension_semantics = [#tpu.dimension_semantics<arbitrary>], iteration_bounds = array<i64: 1>, scalar_prefetch = 1 : i64, scratch_operands = 1 : i64, tpu.core_type = #tpu.core_type<tc>, window_params = [{pipeline_mode = #tpu.pipeline_mode<synchronous>, transform_indices = @transform_0, window_bounds = array<i64: 16, 64>}, {pipeline_mode = #tpu.pipeline_mode<synchronous>, transform_indices = @transform_1, window_bounds = array<i64: 8, 128>}, {pipeline_mode = #tpu.pipeline_mode<synchronous>, transform_indices = @transform_2, window_bounds = array<i64: 192, 512>}, {pipeline_mode = #tpu.pipeline_mode<synchronous>, transform_indices = @transform_3, window_bounds = array<i64: 1, 512>}, {transform_indices = @transform_4, window_bounds = array<i64: 1, 8, 128>}]} {
    %c0_i32 = arith.constant 0 : i32
    %0 = arith.cmpi eq, %arg0, %c0_i32 : i32
    %1 = arith.extui %0 : i1 to i32
    %c0_i32_0 = arith.constant 0 : i32
    %2 = arith.cmpi ne, %1, %c0_i32_0 : i32
    scf.if %2 {
      %c0_21 = arith.constant 0 : index
      %c0_22 = arith.constant 0 : index
      %64 = vector.load %arg3[%c0_21, %c0_22] : memref<8x128xf32, #tpu.memory_space<vmem>>, vector<8x128xf32>
      %c0_23 = arith.constant 0 : index
      %c0_24 = arith.constant 0 : index
      %65 = vector.load %arg7[%c0_23, %c0_24] : memref<8x128xf32, #tpu.memory_space<vmem>>, vector<8x128xf32>
      tpu.vector_store %arg7[%c0_23, %c0_24], %64 {strides = array<i32>} : memref<8x128xf32, #tpu.memory_space<vmem>>, vector<8x128xf32>,
    } else {
    }
    %c0 = arith.constant 0 : index
    %c0_1 = arith.constant 0 : index
    %3 = vector.load %arg7[%c0, %c0_1] : memref<8x128xf32, #tpu.memory_space<vmem>>, vector<8x128xf32>
    %4 = arith.index_cast %arg0 : i32 to index
    %c0_2 = arith.constant 0 : index
    %5 = memref.load %arg1[%4, %c0_2] : memref<1x8xi32, #tpu.memory_space<smem>>
    %6 = arith.index_cast %5 : i32 to index
    %c0_3 = arith.constant 0 : index
    %7 = vector.load %arg2[%6, %c0_3] : memref<16x64xf32, #tpu.memory_space<vmem>>, vector<1x64xf32>
    %8 = arith.index_cast %arg0 : i32 to index
    %c1 = arith.constant 1 : index
    %9 = memref.load %arg1[%8, %c1] : memref<1x8xi32, #tpu.memory_space<smem>>
    %10 = arith.index_cast %9 : i32 to index
    %c0_4 = arith.constant 0 : index
    %11 = vector.load %arg2[%10, %c0_4] : memref<16x64xf32, #tpu.memory_space<vmem>>, vector<1x64xf32>
    %12 = arith.index_cast %arg0 : i32 to index
    %c2 = arith.constant 2 : index
    %13 = memref.load %arg1[%12, %c2] : memref<1x8xi32, #tpu.memory_space<smem>>
    %14 = arith.index_cast %13 : i32 to index
    %c0_5 = arith.constant 0 : index
    %15 = vector.load %arg2[%14, %c0_5] : memref<16x64xf32, #tpu.memory_space<vmem>>, vector<1x64xf32>
    %16 = arith.index_cast %arg0 : i32 to index
    %c3 = arith.constant 3 : index
    %17 = memref.load %arg1[%16, %c3] : memref<1x8xi32, #tpu.memory_space<smem>>
    %18 = arith.index_cast %17 : i32 to index
    %c0_6 = arith.constant 0 : index
    %19 = vector.load %arg2[%18, %c0_6] : memref<16x64xf32, #tpu.memory_space<vmem>>, vector<1x64xf32>
    %20 = arith.index_cast %arg0 : i32 to index
    %c4 = arith.constant 4 : index
    %21 = memref.load %arg1[%20, %c4] : memref<1x8xi32, #tpu.memory_space<smem>>
    %22 = arith.index_cast %21 : i32 to index
    %c0_7 = arith.constant 0 : index
    %23 = vector.load %arg2[%22, %c0_7] : memref<16x64xf32, #tpu.memory_space<vmem>>, vector<1x64xf32>
    %24 = arith.index_cast %arg0 : i32 to index
    %c5 = arith.constant 5 : index
    %25 = memref.load %arg1[%24, %c5] : memref<1x8xi32, #tpu.memory_space<smem>>
    %26 = arith.index_cast %25 : i32 to index
    %c0_8 = arith.constant 0 : index
    %27 = vector.load %arg2[%26, %c0_8] : memref<16x64xf32, #tpu.memory_space<vmem>>, vector<1x64xf32>
    %28 = arith.index_cast %arg0 : i32 to index
    %c6 = arith.constant 6 : index
    %29 = memref.load %arg1[%28, %c6] : memref<1x8xi32, #tpu.memory_space<smem>>
    %30 = arith.index_cast %29 : i32 to index
    %c0_9 = arith.constant 0 : index
    %31 = vector.load %arg2[%30, %c0_9] : memref<16x64xf32, #tpu.memory_space<vmem>>, vector<1x64xf32>
    %32 = arith.index_cast %arg0 : i32 to index
    %c7 = arith.constant 7 : index
    %33 = memref.load %arg1[%32, %c7] : memref<1x8xi32, #tpu.memory_space<smem>>
    %34 = arith.index_cast %33 : i32 to index
    %c0_10 = arith.constant 0 : index
    %35 = vector.load %arg2[%34, %c0_10] : memref<16x64xf32, #tpu.memory_space<vmem>>, vector<1x64xf32>
    %36 = tpu.concatenate %7, %11, %15, %19, %23, %27, %31, %35 in 0 : vector<1x64xf32>, vector<1x64xf32>, vector<1x64xf32>, vector<1x64xf32>, vector<1x64xf32>, vector<1x64xf32>, vector<1x64xf32>, vector<1x64xf32> -> vector<8x64xf32>
    %37 = tpu.concatenate %3, %36 in 1 : vector<8x128xf32>, vector<8x64xf32> -> vector<8x192xf32>
    %38 = arith.truncf %37 : vector<8x192xf32> to vector<8x192xbf16>
    %c0_11 = arith.constant 0 : index
    %c0_12 = arith.constant 0 : index
    %39 = vector.load %arg4[%c0_11, %c0_12] : memref<192x512xbf16, #tpu.memory_space<vmem>>, vector<192x512xbf16>
    %cst = arith.constant dense<0.000000e+00> : vector<8x512xf32>
    %40 = tpu.matmul %38, %39, %cst {dimension_numbers = #tpu.dot_dimension_numbers<[1], [0], [0], [1], [0, 0, 1, 1], [], []>} : vector<8x192xbf16>, vector<192x512xbf16>, vector<8x512xf32> -> vector<8x512xf32>
    %c0_13 = arith.constant 0 : index
    %c0_14 = arith.constant 0 : index
    %41 = vector.load %arg5[%c0_13, %c0_14] : memref<1x512xf32, #tpu.memory_space<vmem>>, vector<1x512xf32>
    %42 = vector.broadcast %41 : vector<1x512xf32> to vector<8x512xf32>
    %43 = arith.addf %40, %42 : vector<8x512xf32>
    %44 = vector.extract_strided_slice %43 {offsets = [0, 0], sizes = [8, 256], strides = [1, 1]} : vector<8x512xf32> to vector<8x256xf32>
    %45 = arith.negf %44 : vector<8x256xf32>
    %46 = math.exp %45 : vector<8x256xf32>
    %cst_15 = arith.constant 1.000000e+00 : f32
    %47 = vector.broadcast %cst_15 : f32 to vector<8x256xf32>
    %48 = arith.addf %47, %46 : vector<8x256xf32>
    %49 = arith.divf %47, %48 : vector<8x256xf32>
    %50 = vector.extract_strided_slice %49 {offsets = [0, 0], sizes = [8, 128], strides = [1, 1]} : vector<8x256xf32> to vector<8x128xf32>
    %51 = vector.extract_strided_slice %49 {offsets = [0, 128], sizes = [8, 128], strides = [1, 1]} : vector<8x256xf32> to vector<8x128xf32>
    %52 = vector.extract_strided_slice %43 {offsets = [0, 256], sizes = [8, 128], strides = [1, 1]} : vector<8x512xf32> to vector<8x128xf32>
    %53 = vector.extract_strided_slice %43 {offsets = [0, 384], sizes = [8, 128], strides = [1, 1]} : vector<8x512xf32> to vector<8x128xf32>
    %54 = arith.mulf %50, %53 : vector<8x128xf32>
    %55 = arith.addf %52, %54 : vector<8x128xf32>
    %56 = math.tanh %55 : vector<8x128xf32>
    %57 = arith.subf %3, %56 : vector<8x128xf32>
    %58 = arith.mulf %51, %57 : vector<8x128xf32>
    %59 = arith.addf %56, %58 : vector<8x128xf32>
    %c0_16 = arith.constant 0 : index
    %c0_17 = arith.constant 0 : index
    %60 = vector.load %arg7[%c0_16, %c0_17] : memref<8x128xf32, #tpu.memory_space<vmem>>, vector<8x128xf32>
    tpu.vector_store %arg7[%c0_16, %c0_17], %59 {strides = array<i32>} : memref<8x128xf32, #tpu.memory_space<vmem>>, vector<8x128xf32>,
    %c0_18 = arith.constant 0 : index
    %c0_19 = arith.constant 0 : index
    %c0_20 = arith.constant 0 : index
    %61 = vector.load %arg6[%c0_18, %c0_19, %c0_20] : memref<1x8x128xf32, #tpu.memory_space<vmem>>, vector<1x8x128xf32>
    %62 = vector.shape_cast %61 : vector<1x8x128xf32> to vector<8x128xf32>
    %63 = vector.shape_cast %59 : vector<8x128xf32> to vector<1x8x128xf32>
    tpu.vector_store %arg6[%c0_18, %c0_19, %c0_20], %63 {strides = array<i32>} : memref<1x8x128xf32, #tpu.memory_space<vmem>>, vector<1x8x128xf32>,
    return
  }
  func.func @transform_0(%arg0: i32, %arg1: memref<1x8xi32, #tpu.memory_space<smem>>) -> (i32, i32) {
    %c0_i32 = arith.constant 0 : i32
    %c0_i32_0 = arith.constant 0 : i32
    %c0_i32_1 = arith.constant 0 : i32
    return %c0_i32, %c0_i32_0 : i32, i32
  }
  func.func @transform_1(%arg0: i32, %arg1: memref<1x8xi32, #tpu.memory_space<smem>>) -> (i32, i32) {
    %c0_i32 = arith.constant 0 : i32
    %c0_i32_0 = arith.constant 0 : i32
    %c0_i32_1 = arith.constant 0 : i32
    return %c0_i32, %c0_i32_0 : i32, i32
  }
  func.func @transform_2(%arg0: i32, %arg1: memref<1x8xi32, #tpu.memory_space<smem>>) -> (i32, i32) {
    %c0_i32 = arith.constant 0 : i32
    %c0_i32_0 = arith.constant 0 : i32
    %c0_i32_1 = arith.constant 0 : i32
    return %c0_i32, %c0_i32_0 : i32, i32
  }
  func.func @transform_3(%arg0: i32, %arg1: memref<1x8xi32, #tpu.memory_space<smem>>) -> (i32, i32) {
    %c0_i32 = arith.constant 0 : i32
    %c0_i32_0 = arith.constant 0 : i32
    %c0_i32_1 = arith.constant 0 : i32
    return %c0_i32, %c0_i32_0 : i32, i32
  }
  func.func @transform_4(%arg0: i32, %arg1: memref<1x8xi32, #tpu.memory_space<smem>>) -> (i32, i32, i32) {
    %c0_i32 = arith.constant 0 : i32
    %c0_i32_0 = arith.constant 0 : i32
    %c0_i32_1 = arith.constant 0 : i32
    return %arg0, %c0_i32, %c0_i32_0 : i32, i32, i32
  }
}

</mosaic_0001>

<llo_original>
// kernel: tpu_custom_call.1
$region0: #{tpu_custom_call.1}
  #allocation0 [shape = 'u32[]', space=smem, size = 0x4, offset = 0x4, fixed_abs, tag = 'smem constant byte address 0x4 - core index']
  #allocation1 [shape = 'u32[144,128]{1,0:T(1,128)}', space=vmem, size = 0x12000, scoped, tag = 'internal scratch']
  #allocation2 [shape = 'f32[8,128]{1,0:T(8,128)}', space=vmem, size = 0x1000, scoped, tag = 'scratch operand']
  #allocation3 [shape = 's32[1]{0}', space=sflag, size = 0x4, scoped, tag = 'scoped memory for tpu_custom_call.1']
  #allocation4 [shape = 'u8[512]{0}', space=smem, size = 0x200, scoped, tag = 'prefetched SMEM operand 0']
  %s0 = inlined_call_operand.hbm [shape: s32[1,8], index: 0, kind: input, shape index: {}]
  %s1 = inlined_call_operand.hbm [shape: f32[16,64], index: 1, kind: input, shape index: {}]
  %s2 = inlined_call_operand.hbm [shape: f32[8,128], index: 2, kind: input, shape index: {}]
  %s3 = inlined_call_operand.hbm [shape: bf16[192,512], index: 3, kind: input, shape index: {}]
  %s4 = inlined_call_operand.vmem [shape: f32[1,512], index: 4, kind: input, shape index: {}]
  %s5 = inlined_call_operand.hbm [shape: f32[1,8,128], index: 5, kind: output, shape index: {}]
  %s6 = sld [smem:[#allocation0]]
  $region42: #{tpu_custom_call.1} parent=0
    _
  %s8 = ssub.s32 1, %s6
  %s9 = scalar_select 0, %s8, %s6
  %11 = dma.hbm_to_smem %s0, 16, [#allocation4], [#allocation3]
  %12 = dma.done [#allocation3], 16
  %13 = sfence
  $region1: #{tpu_custom_call.1} parent=0
    #allocation5 [shape = 'u8[8192]{0}', space=vmem, size = 0x2000, scoped, tag = 'input window, operand 1, single buffered']
    #allocation6 [shape = 's32[1]{0}', space=sflag, size = 0x4, scoped, tag = 'scoped memory for tpu_custom_call.1']
    #allocation7 [shape = 's32[1]{0}', space=sflag, size = 0x4, scoped, tag = 'scoped memory for tpu_custom_call.1']
    #allocation8 [shape = 'u8[4096]{0}', space=vmem, size = 0x1000, scoped, tag = 'input window, operand 2, single buffered']
    #allocation9 [shape = 's32[1]{0}', space=sflag, size = 0x4, scoped, tag = 'scoped memory for tpu_custom_call.1']
    #allocation10 [shape = 'u8[196608]{0}', space=vmem, size = 0x30000, scoped, tag = 'input window, operand 3, single buffered']
    #allocation11 [shape = 'u8[4096]{0}', space=vmem, size = 0x1000, scoped, tag = 'output window, operand 0, single buffered']
    %14 = vsyncpa [#allocation6], 0
    %15 = vsyncpa [#allocation9], 0
    %16 = vsyncpa [#allocation7], 0
    // Predicated region
    $region2: #{tpu_custom_call.1} parent=1 // pred_check
      _
    $region3: #{tpu_custom_call.1} parent=1 // pred_check_branch
      %18 = sbr.rel (0) target = $region5
    $region4: #{tpu_custom_call.1} parent=1 // pred_region
      %s20 = ssub.s32 256, 256
      %21 = vsyncadd [#allocation6], %s20
      %s22 = sshll.u32 [#allocation5], 4
      %s23 = int_to_ptr.vmem [resolvable:$true] %s22
      %28 = dma.hbm_to_vmem [thread:$0]  %s1, 256, %s23, [#allocation6], 128, 128, 8
    $region5: #{tpu_custom_call.1} parent=1 // pred_fallthru
      _
    // Predicated region
    $region6: #{tpu_custom_call.1} parent=1 // pred_check
      _
    $region7: #{tpu_custom_call.1} parent=1 // pred_check_branch
      %30 = sbr.rel (0) target = $region9
    $region8: #{tpu_custom_call.1} parent=1 // pred_region
      %s32 = ssub.s32 128, 128
      %33 = vsyncadd [#allocation9], %s32
      %s35 = sshll.u32 [#allocation8], 4
      %s36 = int_to_ptr.vmem [resolvable:$true] %s35
      %38 = dma.hbm_to_vmem [thread:$0]  %s2, 128, %s36, [#allocation9]
    $region9: #{tpu_custom_call.1} parent=1 // pred_fallthru
      _
    // Predicated region
    $region10: #{tpu_custom_call.1} parent=1 // pred_check
      _
    $region11: #{tpu_custom_call.1} parent=1 // pred_check_branch
      %40 = sbr.rel (0) target = $region13
    $region12: #{tpu_custom_call.1} parent=1 // pred_region
      %s42 = ssub.s32 6144, 6144
      %43 = vsyncadd [#allocation9], %s42
      %s44 = sshll.u32 [#allocation10], 4
      %s45 = int_to_ptr.vmem [resolvable:$true] %s44
      %50 = dma.hbm_to_vmem [thread:$0]  %s3, 6144, %s45, [#allocation9], 256, 256, 16
    $region13: #{tpu_custom_call.1} parent=1 // pred_fallthru
      _
    // Predicated region
    $region14: #{tpu_custom_call.1} parent=1 // pred_check
      _
    $region15: #{tpu_custom_call.1} parent=1 // pred_check_branch
      %52 = sbr.rel (0) target = $region17
    $region16: #{tpu_custom_call.1} parent=1 // pred_region
      _
    $region17: #{tpu_custom_call.1} parent=1 // pred_fallthru
      _
    // Predicated region
    $region18: #{tpu_custom_call.1} parent=1 // pred_check
      _
    $region19: #{tpu_custom_call.1} parent=1 // pred_check_branch
      %54 = sbr.rel (0) target = $region21
    $region20: #{tpu_custom_call.1} parent=1 // pred_region
      %55 = dma.done [#allocation6], 256
    $region21: #{tpu_custom_call.1} parent=1 // pred_fallthru
      _
    // Predicated region
    $region22: #{tpu_custom_call.1} parent=1 // pred_check
      _
    $region23: #{tpu_custom_call.1} parent=1 // pred_check_branch
      %57 = sbr.rel (0) target = $region25
    $region24: #{tpu_custom_call.1} parent=1 // pred_region
      %58 = dma.done [#allocation9], 128
    $region25: #{tpu_custom_call.1} parent=1 // pred_fallthru
      _
    // Predicated region
    $region26: #{tpu_custom_call.1} parent=1 // pred_check
      _
    $region27: #{tpu_custom_call.1} parent=1 // pred_check_branch
      %60 = sbr.rel (0) target = $region29
    $region28: #{tpu_custom_call.1} parent=1 // pred_region
      %61 = dma.done [#allocation9], 6144
    $region29: #{tpu_custom_call.1} parent=1 // pred_fallthru
      _
    %p63 = scmp.eq.s32.totalorder 0, 0
    // Predicated region
    $region30: #{tpu_custom_call.1} parent=1 // pred_check
      %p64 = pneg %p63
    $region31: #{tpu_custom_call.1} parent=1 // pred_check_branch
      %66 = sbr.rel (%p64) target = $region33
    $region32: #{tpu_custom_call.1} parent=1 // pred_region
      %v67 = vld [vmem:[#allocation8] sm:$0xff]
      %68 = vst [vmem:[#allocation2] sm:$0xff] %v67
    $region33: #{tpu_custom_call.1} parent=1 // pred_fallthru
      _
    %v69 = vld [vmem:[#allocation2] sm:$0xff]
    %s70 = smul.u32 0, 128
    %s71 = sld [smem:[#allocation4 + %s70]]
    %s72 = scalar_lea.vmem [#allocation5], %s71
    %v73 = vld [vmem:[%s72] sm:$0x1]
    %s74 = sadd.s32 %s70, 1
    %s75 = sld [smem:[#allocation4 + %s74]]
    %s76 = scalar_lea.vmem [#allocation5], %s75
    %v77 = vld [vmem:[%s76] sm:$0x1]
    %s78 = sadd.s32 %s70, 2
    %s79 = sld [smem:[#allocation4 + %s78]]
    %s80 = scalar_lea.vmem [#allocation5], %s79
    %v81 = vld [vmem:[%s80] sm:$0x1]
    %s82 = sadd.s32 %s70, 3
    %s83 = sld [smem:[#allocation4 + %s82]]
    %s84 = scalar_lea.vmem [#allocation5], %s83
    %v85 = vld [vmem:[%s84] sm:$0x1]
    %s86 = sadd.s32 %s70, 4
    %s87 = sld [smem:[#allocation4 + %s86]]
    %s88 = scalar_lea.vmem [#allocation5], %s87
    %v89 = vld [vmem:[%s88] sm:$0x1]
    %s90 = sadd.s32 %s70, 5
    %s91 = sld [smem:[#allocation4 + %s90]]
    %s92 = scalar_lea.vmem [#allocation5], %s91
    %v93 = vld [vmem:[%s92] sm:$0x1]
    %s94 = sadd.s32 %s70, 6
    %s95 = sld [smem:[#allocation4 + %s94]]
    %s96 = scalar_lea.vmem [#allocation5], %s95
    %v97 = vld [vmem:[%s96] sm:$0x1]
    %s98 = sadd.s32 %s70, 7
    %s99 = sld [smem:[#allocation4 + %s98]]
    %s100 = scalar_lea.vmem [#allocation5], %s99
    %v101 = vld [vmem:[%s100] sm:$0x1]
    %v103 = vrot.slane %v77, 7
    %v106 = vrot.slane %v81, 6
    %v109 = vrot.slane %v85, 5
    %v112 = vrot.slane %v89, 4
    %v115 = vrot.slane %v93, 3
    %v118 = vrot.slane %v97, 2
    %v121 = vrot.slane %v101, 1
    %vm123 = vcmask 1040384
    %v124 = vsel %vm123, %v73, %v103
    %vm125 = vcmask 1041408
    %v126 = vsel %vm125, %v124, %v106
    %vm127 = vcmask 1042432
    %v128 = vsel %vm127, %v126, %v109
    %vm129 = vcmask 1043456
    %v130 = vsel %vm129, %v128, %v112
    %vm131 = vcmask 1044480
    %v132 = vsel %vm131, %v130, %v115
    %vm133 = vcmask 1045504
    %v134 = vsel %vm133, %v132, %v118
    %vm135 = vcmask 1046528
    %v136 = vsel %vm135, %v134, %v121
    %v137 = vpack.c.bf16 %v69, %v69
    %v138 = vpack.c.bf16 %v136, %v136
    %v139 = vld [vmem:[#allocation10] sm:$0xff]
    %v140 = vld [vmem:[#allocation10 + $0x8] sm:$0xff]
    %v141 = vld [vmem:[#allocation10 + $0x10] sm:$0xff]
    %v142 = vld [vmem:[#allocation10 + $0x18] sm:$0xff]
    %v143 = vld [vmem:[#allocation10 + $0x20] sm:$0xff]
    %v144 = vld [vmem:[#allocation10 + $0x28] sm:$0xff]
    %v145 = vld [vmem:[#allocation10 + $0x30] sm:$0xff]
    %v146 = vld [vmem:[#allocation10 + $0x38] sm:$0xff]
    %v147 = vld [vmem:[#allocation10 + $0x40] sm:$0xff]
    %v148 = vld [vmem:[#allocation10 + $0x48] sm:$0xff]
    %v149 = vld [vmem:[#allocation10 + $0x50] sm:$0xff]
    %v150 = vld [vmem:[#allocation10 + $0x58] sm:$0xff]
    %v151 = vld [vmem:[#allocation10 + $0x60] sm:$0xff]
    %v152 = vld [vmem:[#allocation10 + $0x68] sm:$0xff]
    %v153 = vld [vmem:[#allocation10 + $0x70] sm:$0xff]
    %v154 = vld [vmem:[#allocation10 + $0x78] sm:$0xff]
    %v155 = vld [vmem:[#allocation10 + $0x80] sm:$0xff]
    %v156 = vld [vmem:[#allocation10 + $0x88] sm:$0xff]
    %v157 = vld [vmem:[#allocation10 + $0x90] sm:$0xff]
    %v158 = vld [vmem:[#allocation10 + $0x98] sm:$0xff]
    %v159 = vld [vmem:[#allocation10 + $0xa0] sm:$0xff]
    %v160 = vld [vmem:[#allocation10 + $0xa8] sm:$0xff]
    %v161 = vld [vmem:[#allocation10 + $0xb0] sm:$0xff]
    %v162 = vld [vmem:[#allocation10 + $0xb8] sm:$0xff]
    %v163 = vld [vmem:[#allocation10 + $0xc0] sm:$0xff]
    %v164 = vld [vmem:[#allocation10 + $0xc8] sm:$0xff]
    %v165 = vld [vmem:[#allocation10 + $0xd0] sm:$0xff]
    %v166 = vld [vmem:[#allocation10 + $0xd8] sm:$0xff]
    %v167 = vld [vmem:[#allocation10 + $0xe0] sm:$0xff]
    %v168 = vld [vmem:[#allocation10 + $0xe8] sm:$0xff]
    %v169 = vld [vmem:[#allocation10 + $0xf0] sm:$0xff]
    %v170 = vld [vmem:[#allocation10 + $0xf8] sm:$0xff]
    %v171 = vld [vmem:[#allocation10 + $0x100] sm:$0xff]
    %v172 = vld [vmem:[#allocation10 + $0x108] sm:$0xff]
    %v173 = vld [vmem:[#allocation10 + $0x110] sm:$0xff]
    %v174 = vld [vmem:[#allocation10 + $0x118] sm:$0xff]
    %v175 = vld [vmem:[#allocation10 + $0x120] sm:$0xff]
    %v176 = vld [vmem:[#allocation10 + $0x128] sm:$0xff]
    %v177 = vld [vmem:[#allocation10 + $0x130] sm:$0xff]
    %v178 = vld [vmem:[#allocation10 + $0x138] sm:$0xff]
    %v179 = vld [vmem:[#allocation10 + $0x140] sm:$0xff]
    %v180 = vld [vmem:[#allocation10 + $0x148] sm:$0xff]
    %v181 = vld [vmem:[#allocation10 + $0x150] sm:$0xff]
    %v182 = vld [vmem:[#allocation10 + $0x158] sm:$0xff]
    %v183 = vld [vmem:[#allocation10 + $0x160] sm:$0xff]
    %v184 = vld [vmem:[#allocation10 + $0x168] sm:$0xff]
    %v185 = vld [vmem:[#allocation10 + $0x170] sm:$0xff]
    %v186 = vld [vmem:[#allocation10 + $0x178] sm:$0xff]
    %v187 = vld [vmem:[%s4] sm:$0xf]
    %v189 = vlaneseq
    %v190 = vshrl.u32 %v189, 7
    %v191 = vsub.s32 0, %v190
    %v192 = vrot.slane %v187, %v191
    %v193 = vlaneseq
    %v194 = vshrl.u32 %v193, 7
    %v195 = vsub.s32 1, %v194
    %v196 = vrot.slane %v187, %v195
    %v197 = vlaneseq
    %v198 = vshrl.u32 %v197, 7
    %v199 = vsub.s32 2, %v198
    %v200 = vrot.slane %v187, %v199
    %v201 = vlaneseq
    %v202 = vshrl.u32 %v201, 7
    %v203 = vsub.s32 3, %v202
    %v204 = vrot.slane %v187, %v203
    %v257 = vunpack.c.l.b16 %v139
    %v258 = vunpack.c.h.b16 %v139
    %v259 = vunpack.c.l.b16 %v140
    %v260 = vunpack.c.h.b16 %v140
    %v261 = vunpack.c.l.b16 %v141
    %v262 = vunpack.c.h.b16 %v141
    %v263 = vunpack.c.l.b16 %v142
    %v264 = vunpack.c.h.b16 %v142
    %v265 = vunpack.c.l.b16 %v143
    %v266 = vunpack.c.h.b16 %v143
    %v267 = vunpack.c.l.b16 %v144
    %v268 = vunpack.c.h.b16 %v144
    %v269 = vunpack.c.l.b16 %v145
    %v270 = vunpack.c.h.b16 %v145
    %v271 = vunpack.c.l.b16 %v146
    %v272 = vunpack.c.h.b16 %v146
    %v273 = vunpack.c.l.b16 %v147
    %v274 = vunpack.c.h.b16 %v147
    %v275 = vunpack.c.l.b16 %v148
    %v276 = vunpack.c.h.b16 %v148
    %v277 = vunpack.c.l.b16 %v149
    %v278 = vunpack.c.h.b16 %v149
    %v279 = vunpack.c.l.b16 %v150
    %v280 = vunpack.c.h.b16 %v150
    %v281 = vunpack.c.l.b16 %v151
    %v282 = vunpack.c.h.b16 %v151
    %v283 = vunpack.c.l.b16 %v152
    %v284 = vunpack.c.h.b16 %v152
    %v285 = vunpack.c.l.b16 %v153
    %v286 = vunpack.c.h.b16 %v153
    %v287 = vunpack.c.l.b16 %v154
    %v288 = vunpack.c.h.b16 %v154
    %v289 = vunpack.c.l.b16 %v155
    %v290 = vunpack.c.h.b16 %v155
    %v291 = vunpack.c.l.b16 %v156
    %v292 = vunpack.c.h.b16 %v156
    %v293 = vunpack.c.l.b16 %v157
    %v294 = vunpack.c.h.b16 %v157
    %v295 = vunpack.c.l.b16 %v158
    %v296 = vunpack.c.h.b16 %v158
    %v297 = vunpack.c.l.b16 %v159
    %v298 = vunpack.c.h.b16 %v159
    %v299 = vunpack.c.l.b16 %v160
    %v300 = vunpack.c.h.b16 %v160
    %v301 = vunpack.c.l.b16 %v161
    %v302 = vunpack.c.h.b16 %v161
    %v303 = vunpack.c.l.b16 %v162
    %v304 = vunpack.c.h.b16 %v162
    %v305 = vunpack.c.l.b16 %v163
    %v306 = vunpack.c.h.b16 %v163
    %v307 = vunpack.c.l.b16 %v164
    %v308 = vunpack.c.h.b16 %v164
    %v309 = vunpack.c.l.b16 %v165
    %v310 = vunpack.c.h.b16 %v165
    %v311 = vunpack.c.l.b16 %v166
    %v312 = vunpack.c.h.b16 %v166
    %v313 = vunpack.c.l.b16 %v167
    %v314 = vunpack.c.h.b16 %v167
    %v315 = vunpack.c.l.b16 %v168
    %v316 = vunpack.c.h.b16 %v168
    %v317 = vunpack.c.l.b16 %v169
    %v318 = vunpack.c.h.b16 %v169
    %v319 = vunpack.c.l.b16 %v170
    %v320 = vunpack.c.h.b16 %v170
    %v321 = vunpack.c.l.b16 %v171
    %v322 = vunpack.c.h.b16 %v171
    %v323 = vunpack.c.l.b16 %v172
    %v324 = vunpack.c.h.b16 %v172
    %v325 = vunpack.c.l.b16 %v173
    %v326 = vunpack.c.h.b16 %v173
    %v327 = vunpack.c.l.b16 %v174
    %v328 = vunpack.c.h.b16 %v174
    %v329 = vunpack.c.l.b16 %v175
    %v330 = vunpack.c.h.b16 %v175
    %v331 = vunpack.c.l.b16 %v176
    %v332 = vunpack.c.h.b16 %v176
    %v333 = vunpack.c.l.b16 %v177
    %v334 = vunpack.c.h.b16 %v177
    %v335 = vunpack.c.l.b16 %v178
    %v336 = vunpack.c.h.b16 %v178
    %v337 = vunpack.c.l.b16 %v179
    %v338 = vunpack.c.h.b16 %v179
    %v339 = vunpack.c.l.b16 %v180
    %v340 = vunpack.c.h.b16 %v180
    %v341 = vunpack.c.l.b16 %v181
    %v342 = vunpack.c.h.b16 %v181
    %v343 = vunpack.c.l.b16 %v182
    %v344 = vunpack.c.h.b16 %v182
    %v345 = vunpack.c.l.b16 %v183
    %v346 = vunpack.c.h.b16 %v183
    %v347 = vunpack.c.l.b16 %v184
    %v348 = vunpack.c.h.b16 %v184
    %v349 = vunpack.c.l.b16 %v185
    %v350 = vunpack.c.h.b16 %v185
    %v351 = vunpack.c.l.b16 %v186
    %v352 = vunpack.c.h.b16 %v186
    %v353 = vpack.c.b16 %v261, %v257
    %v354 = vpack.c.b16 %v262, %v258
    %v355 = vpack.c.b16 %v263, %v259
    %v356 = vpack.c.b16 %v264, %v260
    %v357 = vpack.c.b16 %v269, %v265
    %v358 = vpack.c.b16 %v270, %v266
    %v359 = vpack.c.b16 %v271, %v267
    %v360 = vpack.c.b16 %v272, %v268
    %v361 = vpack.c.b16 %v277, %v273
    %v362 = vpack.c.b16 %v278, %v274
    %v363 = vpack.c.b16 %v279, %v275
    %v364 = vpack.c.b16 %v280, %v276
    %v365 = vpack.c.b16 %v285, %v281
    %v366 = vpack.c.b16 %v286, %v282
    %v367 = vpack.c.b16 %v287, %v283
    %v368 = vpack.c.b16 %v288, %v284
    %v369 = vpack.c.b16 %v293, %v289
    %v370 = vpack.c.b16 %v294, %v290
    %v371 = vpack.c.b16 %v295, %v291
    %v372 = vpack.c.b16 %v296, %v292
    %v373 = vpack.c.b16 %v301, %v297
    %v374 = vpack.c.b16 %v302, %v298
    %v375 = vpack.c.b16 %v303, %v299
    %v376 = vpack.c.b16 %v304, %v300
    %v377 = vpack.c.b16 %v309, %v305
    %v378 = vpack.c.b16 %v310, %v306
    %v379 = vpack.c.b16 %v311, %v307
    %v380 = vpack.c.b16 %v312, %v308
    %v381 = vpack.c.b16 %v317, %v313
    %v382 = vpack.c.b16 %v318, %v314
    %v383 = vpack.c.b16 %v319, %v315
    %v384 = vpack.c.b16 %v320, %v316
    %v385 = vpack.c.b16 %v325, %v321
    %v386 = vpack.c.b16 %v326, %v322
    %v387 = vpack.c.b16 %v327, %v323
    %v388 = vpack.c.b16 %v328, %v324
    %v389 = vpack.c.b16 %v333, %v329
    %v390 = vpack.c.b16 %v334, %v330
    %v391 = vpack.c.b16 %v335, %v331
    %v392 = vpack.c.b16 %v336, %v332
    %v393 = vpack.c.b16 %v341, %v337
    %v394 = vpack.c.b16 %v342, %v338
    %v395 = vpack.c.b16 %v343, %v339
    %v396 = vpack.c.b16 %v344, %v340
    %v397 = vpack.c.b16 %v349, %v345
    %v398 = vpack.c.b16 %v350, %v346
    %v399 = vpack.c.b16 %v351, %v347
    %v400 = vpack.c.b16 %v352, %v348
    %vm449 = vcmask 523264
    %v451 = vsel %vm449, %v138, 0
    %453 = vmatprep.subr.bf16.mxu0 %v382
    %454 = vmatpush1.bf16.msra.mxu0 %v381
    %455 = vmatprep.subr.bf16.mxu0 %v378
    %456 = vmatpush1.bf16.msra.mxu0 %v377
    %457 = vmatprep.subr.bf16.mxu0 %v374
    %458 = vmatpush1.bf16.msra.mxu0 %v373
    %459 = vmatprep.subr.bf16.mxu0 %v370
    %460 = vmatpush1.bf16.msra.mxu0 %v369
    %461 = vmatprep.subr.bf16.mxu0 %v366
    %462 = vmatpush1.bf16.msra.mxu0 %v365
    %463 = vmatprep.subr.bf16.mxu0 %v362
    %464 = vmatpush1.bf16.msra.mxu0 %v361
    %465 = vmatprep.subr.bf16.mxu0 %v358
    %466 = vmatpush1.bf16.msra.mxu0 %v357
    %467 = vmatprep.subr.bf16.mxu0 %v354
    %468 = vmatpush1.bf16.msra.mxu0 %v353
    %469 = vmatprep.subr.bf16.mxu0 0
    %470 = vmatpush2.bf16.msra.mxu0 0
    %471 = vmatprep.subr.bf16.mxu0 0
    %472 = vmatpush2.bf16.msra.mxu0 0
    %473 = vmatprep.subr.bf16.mxu0 0
    %474 = vmatpush2.bf16.msra.mxu0 0
    %475 = vmatprep.subr.bf16.mxu0 0
    %476 = vmatpush2.bf16.msra.mxu0 0
    %477 = vmatprep.subr.bf16.mxu0 %v398
    %478 = vmatpush2.bf16.msra.mxu0 %v397
    %479 = vmatprep.subr.bf16.mxu0 %v394
    %480 = vmatpush2.bf16.msra.mxu0 %v393
    %481 = vmatprep.subr.bf16.mxu0 %v390
    %482 = vmatpush2.bf16.msra.mxu0 %v389
    %483 = vmatprep.subr.bf16.mxu0 %v386
    %484 = vmatpush2.bf16.msra.mxu0 %v385
    %485 = vmatprep.mubr.bf16.mxu0 %v451
    %486 = vmatmul.mubr.bf16.gmra.mxu0 %v137
    %v487 = vpop.f32.mrf.mxu0
    %v488 = vadd.f32 %v192, %v487
    %v489 = vpop.f32.mrf.mxu0
    %v490 = vadd.f32 %v196, %v489
    %v491 = vpop.f32.mrf.mxu0
    %v492 = vpop.f32.mrf.mxu0
    %493 = vdwg.mxu0
    %494 = vmatprep.subr.bf16.mxu0 %v384
    %495 = vmatpush1.bf16.msra.mxu0 %v383
    %496 = vmatprep.subr.bf16.mxu0 %v380
    %497 = vmatpush1.bf16.msra.mxu0 %v379
    %498 = vmatprep.subr.bf16.mxu0 %v376
    %499 = vmatpush1.bf16.msra.mxu0 %v375
    %500 = vmatprep.subr.bf16.mxu0 %v372
    %501 = vmatpush1.bf16.msra.mxu0 %v371
    %502 = vmatprep.subr.bf16.mxu0 %v368
    %503 = vmatpush1.bf16.msra.mxu0 %v367
    %504 = vmatprep.subr.bf16.mxu0 %v364
    %505 = vmatpush1.bf16.msra.mxu0 %v363
    %506 = vmatprep.subr.bf16.mxu0 %v360
    %507 = vmatpush1.bf16.msra.mxu0 %v359
    %508 = vmatprep.subr.bf16.mxu0 %v356
    %509 = vmatpush1.bf16.msra.mxu0 %v355
    %510 = vmatprep.subr.bf16.mxu0 0
    %511 = vmatpush2.bf16.msra.mxu0 0
    %512 = vmatprep.subr.bf16.mxu0 0
    %513 = vmatpush2.bf16.msra.mxu0 0
    %514 = vmatprep.subr.bf16.mxu0 0
    %515 = vmatpush2.bf16.msra.mxu0 0
    %516 = vmatprep.subr.bf16.mxu0 0
    %517 = vmatpush2.bf16.msra.mxu0 0
    %518 = vmatprep.subr.bf16.mxu0 %v400
    %519 = vmatpush2.bf16.msra.mxu0 %v399
    %520 = vmatprep.subr.bf16.mxu0 %v396
    %521 = vmatpush2.bf16.msra.mxu0 %v395
    %522 = vmatprep.subr.bf16.mxu0 %v392
    %523 = vmatpush2.bf16.msra.mxu0 %v391
    %524 = vmatprep.subr.bf16.mxu0 %v388
    %525 = vmatpush2.bf16.msra.mxu0 %v387
    %526 = vmatprep.mubr.bf16.mxu0 %v451
    %527 = vmatmul.mubr.bf16.gmra.mxu0 %v137
    %v528 = vpop.f32.mrf.mxu0
    %v529 = vadd.f32 %v200, %v528
    %v530 = vpop.f32.mrf.mxu0
    %v531 = vadd.f32 %v204, %v530
    %v532 = vpop.f32.mrf.mxu0
    %v533 = vpop.f32.mrf.mxu0
    %534 = vdwg.mxu0
    %v535 = vxor.u32 %v488, 2147483648
    %v536 = vxor.u32 %v490, 2147483648
    %v537 = vmul.f32 %v535, 1.442695
    %v538 = vpow.pop %v537
    %v539 = vmul.f32 %v536, 1.442695
    %v540 = vpow.pop %v539
    %v541 = vadd.f32 %v538, 1.0
    %v542 = vadd.f32 %v540, 1.0
    %v543 = vrcp.pop %v541
    %v544 = vmul.f32 1.0, %v543
    %v545 = vrcp.pop %v542
    %v546 = vmul.f32 1.0, %v545
    %v547 = vmul.f32 %v544, %v531
    %v548 = vadd.f32 %v529, %v547
    %v549 = vtanh.pop %v548
    %v550 = vsub.f32 %v69, %v549
    %v551 = vmul.f32 %v546, %v550
    %v552 = vadd.f32 %v549, %v551
    %553 = vst [vmem:[#allocation2] sm:$0xff] %v552
    %554 = vst [vmem:[#allocation11] sm:$0xff] %v552
    // Predicated region
    $region34: #{tpu_custom_call.1} parent=1 // pred_check
      _
    $region35: #{tpu_custom_call.1} parent=1 // pred_check_branch
      %556 = sbr.rel (0) target = $region37
    $region36: #{tpu_custom_call.1} parent=1 // pred_region
      %s558 = ssub.s32 128, 128
      %559 = vsyncadd [#allocation7], %s558
      %s561 = sshll.u32 [#allocation11], 4
      %s562 = int_to_ptr.vmem [resolvable:$true] %s561
      %564 = dma.vmem_to_hbm [thread:$0]  %s562, 128, %s5, [#allocation7]
    $region37: #{tpu_custom_call.1} parent=1 // pred_fallthru
      _
    // Predicated region
    $region38: #{tpu_custom_call.1} parent=1 // pred_check
      _
    $region39: #{tpu_custom_call.1} parent=1 // pred_check_branch
      %566 = sbr.rel (0) target = $region41
    $region40: #{tpu_custom_call.1} parent=1 // pred_region
      %567 = dma.done [#allocation7], 128
    $region41: #{tpu_custom_call.1} parent=1 // pred_fallthru
      _
    %568 = vsyncpa [#allocation6], 1
    %569 = vsyncpa [#allocation9], 1
    %570 = vsyncpa [#allocation7], 1

</llo_original>
